<compile_context>
chip_gen: v6e
topology: v6e:2x2x1
jax: 0.10.0
libtpu: 0.0.40
codegen_flags: <defaults>
</compile_context>

<pallas_src>
import functools
import math
from typing import NamedTuple, Optional

import jax
import jax.numpy as jnp
from jax.experimental import pallas as pl
from jax.experimental.pallas import tpu as pltpu


# ---------------------------------------------------------------------------
# Kernels
# ---------------------------------------------------------------------------
def _ffn_kernel_acc(x_ref, w13_ref, w2_ref, o_ref, acc_ref, *, tile_h):
    """Non-f32 output: accumulate in f32 VMEM scratch, cast on last H step."""
    h = pl.program_id(1)

    @pl.when(h == 0)
    def _():
        acc_ref[...] = jnp.zeros_like(acc_ref)

    x = x_ref[...]
    # Fused up-projection: one matmul producing [h1 | h3] along lanes.
    h13 = jnp.dot(x, w13_ref[...], preferred_element_type=jnp.float32)
    h1 = h13[:, :tile_h]
    h3 = h13[:, tile_h:]
    g = (h1 * jax.nn.sigmoid(h1)) * h3          # silu(h1) * h3
    acc_ref[...] += jnp.dot(g.astype(w2_ref.dtype), w2_ref[...],
                            preferred_element_type=jnp.float32)

    @pl.when(h == pl.num_programs(1) - 1)
    def _():
        o_ref[...] = acc_ref[...].astype(o_ref.dtype)


def _ffn_kernel_direct(x_ref, w13_ref, w2_ref, o_ref, *, tile_h):
    """f32 output: accumulate directly into the resident output block."""
    h = pl.program_id(1)

    @pl.when(h == 0)
    def _():
        o_ref[...] = jnp.zeros_like(o_ref)

    x = x_ref[...]
    h13 = jnp.dot(x, w13_ref[...], preferred_element_type=jnp.float32)
    h1 = h13[:, :tile_h]
    h3 = h13[:, tile_h:]
    g = (h1 * jax.nn.sigmoid(h1)) * h3
    o_ref[...] += jnp.dot(g.astype(w2_ref.dtype), w2_ref[...],
                          preferred_element_type=jnp.float32)


# ---------------------------------------------------------------------------
# Tiling helpers
# ---------------------------------------------------------------------------
def _round_up(x, m):
    return ((x + m - 1) // m) * m


def _pick_divisor_tile(total, preferred, step):
    """Largest tile <= preferred (multiple of `step`) that divides `total`."""
    if total <= preferred:
        return total
    t = max((preferred // step) * step, step)
    while total % t != 0:
        t -= step
        if t < step:
            return total
    return t


def _token_step(dtype):
    """Sublane-alignment step for the token axis, dtype aware."""
    size = jnp.dtype(dtype).itemsize
    if size == 1:
        return 32
    if size == 2:
        return 16
    return 8


def _generation_defaults():
    """Per-TPU-generation tile / VMEM defaults."""
    kind = ""
    try:
        kind = jax.devices()[0].device_kind.lower()
    except Exception:
        pass
    if "v7" in kind:
        # 64 MiB VMEM per TensorCore: smaller footprint, headroom, 2 TCs.
        return dict(tile_t=512, tile_h=256,
                    vmem_limit=56 * 1024 * 1024, want_two_t_blocks=True)
    if "v6" in kind:
        # 128 MiB VMEM, ridge ~650-680 FLOPs/byte: big token tiles.
        return dict(tile_t=1024, tile_h=512,
                    vmem_limit=100 * 1024 * 1024, want_two_t_blocks=False)
    if "v5" in kind:
        # v5e ridge ~240 FLOPs/byte: modest tile_t, large tile_h.
        return dict(tile_t=384, tile_h=1024,
                    vmem_limit=100 * 1024 * 1024, want_two_t_blocks=False)
    return dict(tile_t=512, tile_h=512,
                vmem_limit=64 * 1024 * 1024, want_two_t_blocks=False)


# ---------------------------------------------------------------------------
# Weight packing (do ONCE at load time; not on the per-call hot path)
# ---------------------------------------------------------------------------
class PackedFFNWeights(NamedTuple):
    w13: jax.Array   # [D, 2H]: W1^T | W3^T interleaved per hidden tile
    w2t: jax.Array   # [H, D]:  W2^T
    tile_h: int      # hidden tile the packing was built for


def pack_ffn_weights(w1, w2, w3, *, tile_h: Optional[int] = None):
    """Pack PyTorch-layout weights (w1,w3:[H,D], w2:[D,H]) for the kernel.

    Hidden-tile h of w13 (columns [h*2*tile_h, (h+1)*2*tile_h)) holds W1^T
    tile h followed by W3^T tile h, so one BlockSpec / one DMA / one matmul
    covers both up-projections.
    """
    H, D = w1.shape
    assert w3.shape == (H, D) and w2.shape == (D, H)
    assert D % 128 == 0 and H % 128 == 0, "dim/hidden must be 128-aligned"
    if tile_h is None:
        tile_h = _generation_defaults()["tile_h"]
    tile_h = _pick_divisor_tile(H, tile_h, 128)
    n = H // tile_h
    w1t = jnp.transpose(w1).reshape(D, n, tile_h)
    w3t = jnp.transpose(w3).reshape(D, n, tile_h)
    w13 = jnp.concatenate([w1t, w3t], axis=2).reshape(D, 2 * H)
    return PackedFFNWeights(w13=w13, w2t=jnp.transpose(w2), tile_h=tile_h)


# ---------------------------------------------------------------------------
# Forward
# ---------------------------------------------------------------------------
def feed_forward_packed(x, packed: PackedFFNWeights, *,
                        tile_t: Optional[int] = None,
                        vmem_limit_bytes: Optional[int] = None):
    """x: [..., D]; packed: output of pack_ffn_weights()."""
    defaults = _generation_defaults()
    w13, w2t, tile_h = packed.w13, packed.w2t, packed.tile_h
    D = w13.shape[0]
    H = w2t.shape[0]
    assert w13.shape == (D, 2 * H) and w2t.shape == (H, D)

    orig_shape = x.shape
    assert orig_shape[-1] == D
    x2d = x.reshape(-1, D)
    T = x2d.shape[0]
    out_dtype = x.dtype
    use_scratch = jnp.dtype(out_dtype) != jnp.dtype(jnp.float32)

    if tile_t is None:
        tile_t = defaults["tile_t"]
    if vmem_limit_bytes is None:
        vmem_limit_bytes = defaults["vmem_limit"]

    # Dtype-aware token tile: aligned to the packed sublane count, never
    # larger than the (padded) token count.
    step = _token_step(x.dtype)
    tile_t = max(step, (tile_t // step) * step)
    tile_t = min(tile_t, _round_up(T, step))

    # On v7x, make sure the parallel T axis has >= 2 blocks when T allows so
    # both TensorCores get work.
    if (defaults["want_two_t_blocks"]
            and _round_up(T, tile_t) // tile_t < 2 and T > step):
        tile_t = max(step, _round_up((T + 1) // 2, step))
    # TODO(synk): for single-tile decode shapes (T <= step) add a second
    # parallel grid axis over the output D dimension instead of relying on T.

    # Re-derive the double-buffered working set and shrink tile_t to fit.
    x_b = jnp.dtype(x.dtype).itemsize
    w_b = jnp.dtype(w13.dtype).itemsize
    o_b = jnp.dtype(out_dtype).itemsize

    def _est_vmem(tt):
        return (2 * tt * D * x_b                 # x double-buffer
                + 2 * D * 2 * tile_h * w_b       # w13 double-buffer
                + 2 * tile_h * D * w_b           # w2t double-buffer
                + 2 * tt * D * o_b               # out double-buffer
                + (tt * D * 4 if use_scratch else 0))   # f32 accumulator

    while _est_vmem(tile_t) > vmem_limit_bytes and tile_t > step:
        tile_t = max(step, (tile_t // 2 // step) * step)

    # Pad awkward token counts instead of falling back to one giant block.
    Tp = _round_up(T, tile_t)
    if Tp != T:
        x2d = jnp.pad(x2d, ((0, Tp - T), (0, 0)))

    grid = (Tp // tile_t, H // tile_h)

    if use_scratch:
        kernel = functools.partial(_ffn_kernel_acc, tile_h=tile_h)
        scratch_shapes = [pltpu.VMEM((tile_t, D), jnp.float32)]
    else:
        kernel = functools.partial(_ffn_kernel_direct, tile_h=tile_h)
        scratch_shapes = []

    cost = pl.CostEstimate(
        flops=6 * T * H * D,                       # three T*H*D matmuls
        transcendentals=T * H,                     # sigmoid in silu
        bytes_accessed=int(T * D * (x_b + o_b)     # activations in/out
                           + grid[0] * 3 * H * D * w_b),  # weights per T tile
    )

    out2d = pl.pallas_call(
        kernel,
        out_shape=jax.ShapeDtypeStruct((Tp, D), out_dtype),
        grid_spec=pltpu.PrefetchScalarGridSpec(
            num_scalar_prefetch=0,
            grid=grid,
            in_specs=[
                pl.BlockSpec((tile_t, D), lambda t, h: (t, 0)),         # x
                pl.BlockSpec((D, 2 * tile_h), lambda t, h: (0, h)),     # [W1|W3]^T
                pl.BlockSpec((tile_h, D), lambda t, h: (h, 0)),         # W2^T
            ],
            out_specs=pl.BlockSpec((tile_t, D), lambda t, h: (t, 0)),
            scratch_shapes=scratch_shapes,
        ),
        compiler_params=pltpu.CompilerParams(
            # T axis independent (megacore-shardable); H axis is the
            # reduction over the resident output block.
            dimension_semantics=("parallel", "arbitrary"),
            vmem_limit_bytes=vmem_limit_bytes,
        ),
        cost_estimate=cost,
    )(x2d, w13, w2t)

    if Tp != T:
        out2d = out2d[:T]
    return out2d.reshape(orig_shape)


def feed_forward(x, w1, w2, w3, *, tile_t=None, tile_h=None,
                 vmem_limit_bytes=None):
    """Convenience wrapper (PyTorch nn.Linear layouts: w1,w3:[H,D], w2:[D,H]).

    NOTE: re-packs the weights on every call. For repeated use, call
    pack_ffn_weights() once at load time and use feed_forward_packed().
    """
    packed = pack_ffn_weights(w1, w2, w3, tile_h=tile_h)
    return feed_forward_packed(x, packed, tile_t=tile_t,
                               vmem_limit_bytes=vmem_limit_bytes)


def _hidden_dim(dim, multiple_of, ffn_dim_multiplier=None):
    hidden = 4 * dim
    hidden = int(2 * hidden / 3)
    if ffn_dim_multiplier is not None:
        hidden = int(ffn_dim_multiplier * dim)
    hidden = multiple_of * ((hidden + multiple_of - 1) // multiple_of)
    return hidden


# ---------------------------------------------------------------------------
# Demo / correctness check
# ---------------------------------------------------------------------------
if __name__ == "__main__":
    # Small, TPU-friendly shapes implied by the module:
    #   dim=256, multiple_of=256 -> hidden_dim = 768; batch=2, seq=8 -> T=16.
    dim = 256
    multiple_of = 256
    hidden = _hidden_dim(dim, multiple_of)          # 768
    batch, seq = 2, 8

    key = jax.random.PRNGKey(0)
    kx, k1, k2, k3 = jax.random.split(key, 4)

    def linear_weight(k, out_f, in_f):
        bound = 1.0 / math.sqrt(in_f)
        return jax.random.uniform(k, (out_f, in_f), jnp.float32, -bound, bound)

    x = jax.random.normal(kx, (batch, seq, dim), dtype=jnp.float32)
    w1 = linear_weight(k1, hidden, dim)   # [H, D]
    w2 = linear_weight(k2, dim, hidden)   # [D, H]
    w3 = linear_weight(k3, hidden, dim)   # [H, D]

    # --- f32 path: pre-packed weights (the hot-path API) ---------------------
    packed = pack_ffn_weights(w1, w2, w3)
    out = feed_forward_packed(x, packed)
    jax.block_until_ready(out)

    x2d = x.reshape(-1, dim)
    ref = (jnp.dot(jax.nn.silu(x2d @ w1.T) * (x2d @ w3.T), w2.T)
           ).reshape(batch, seq, dim)
    assert jnp.allclose(out, ref, atol=1e-3, rtol=1e-3), "f32 mismatch vs reference"

    # --- convenience wrapper (packs inline) ----------------------------------
    out_conv = feed_forward(x, w1, w2, w3)
    jax.block_until_ready(out_conv)
    assert jnp.allclose(out_conv, ref, atol=1e-3, rtol=1e-3), \
        "convenience-wrapper mismatch vs reference"

    # --- bf16 path (weights + activations streamed in bf16, f32 accumulate) --
    xb = x.astype(jnp.bfloat16)
    w1b, w2b, w3b = (w.astype(jnp.bfloat16) for w in (w1, w2, w3))
    packed_b = pack_ffn_weights(w1b, w2b, w3b)
    outb = feed_forward_packed(xb, packed_b)
    jax.block_until_ready(outb)

    xb2d = xb.reshape(-1, dim)
    h1 = jnp.dot(xb2d, w1b.T, preferred_element_type=jnp.float32)
    h3 = jnp.dot(xb2d, w3b.T, preferred_element_type=jnp.float32)
    gb = (h1 * jax.nn.sigmoid(h1) * h3).astype(jnp.bfloat16)
    refb = jnp.dot(gb, w2b.T, preferred_element_type=jnp.float32
                   ).astype(jnp.bfloat16).reshape(batch, seq, dim)
    assert jnp.allclose(outb.astype(jnp.float32), refb.astype(jnp.float32),
                        atol=2e-2, rtol=5e-2), "bf16 mismatch vs reference"

    print("KERNEL_OK")
</pallas_src>

<mosaic_0001>
module attributes {stable_mosaic.version = 11 : i64} {
  func.func @_ffn_kernel_direct(%arg0: i32, %arg1: i32, %arg2: memref<16x256xf32, #tpu.memory_space<vmem>>, %arg3: memref<256x768xf32, #tpu.memory_space<vmem>>, %arg4: memref<384x256xf32, #tpu.memory_space<vmem>>, %arg5: memref<16x256xf32, #tpu.memory_space<vmem>>) attributes {dimension_semantics = [#tpu.dimension_semantics<parallel>, #tpu.dimension_semantics<arbitrary>], iteration_bounds = array<i64: 1, 2>, scalar_prefetch = 0 : i64, scratch_operands = 0 : i64, tpu.core_type = #tpu.core_type<tc>, window_params = [{transform_indices = @transform_0, window_bounds = array<i64: 16, 256>}, {transform_indices = @transform_1, window_bounds = array<i64: 256, 768>}, {transform_indices = @transform_2, window_bounds = array<i64: 384, 256>}, {transform_indices = @transform_3, window_bounds = array<i64: 16, 256>}]} {
    %c0_i32 = arith.constant 0 : i32
    %0 = arith.cmpi eq, %arg1, %c0_i32 : i32
    %1 = arith.extui %0 : i1 to i32
    %c0_i32_0 = arith.constant 0 : i32
    %2 = arith.cmpi ne, %1, %c0_i32_0 : i32
    scf.if %2 {
      %cst_12 = arith.constant 0.000000e+00 : f32
      %20 = vector.broadcast %cst_12 : f32 to vector<16x256xf32>
      %c0_13 = arith.constant 0 : index
      %c0_14 = arith.constant 0 : index
      %21 = vector.load %arg5[%c0_13, %c0_14] : memref<16x256xf32, #tpu.memory_space<vmem>>, vector<16x256xf32>
      tpu.vector_store %arg5[%c0_13, %c0_14], %20 {strides = array<i32>} : memref<16x256xf32, #tpu.memory_space<vmem>>, vector<16x256xf32>,
    } else {
    }
    %c0 = arith.constant 0 : index
    %c0_1 = arith.constant 0 : index
    %3 = vector.load %arg2[%c0, %c0_1] : memref<16x256xf32, #tpu.memory_space<vmem>>, vector<16x256xf32>
    %c0_2 = arith.constant 0 : index
    %c0_3 = arith.constant 0 : index
    %4 = vector.load %arg3[%c0_2, %c0_3] : memref<256x768xf32, #tpu.memory_space<vmem>>, vector<256x768xf32>
    %cst = arith.constant dense<0.000000e+00> : vector<16x768xf32>
    %5 = tpu.matmul %3, %4, %cst {dimension_numbers = #tpu.dot_dimension_numbers<[1], [0], [0], [1], [0, 0, 1, 1], [], []>} : vector<16x256xf32>, vector<256x768xf32>, vector<16x768xf32> -> vector<16x768xf32>
    %6 = vector.extract_strided_slice %5 {offsets = [0, 0], sizes = [16, 384], strides = [1, 1]} : vector<16x768xf32> to vector<16x384xf32>
    %7 = vector.extract_strided_slice %5 {offsets = [0, 384], sizes = [16, 384], strides = [1, 1]} : vector<16x768xf32> to vector<16x384xf32>
    %8 = arith.negf %6 : vector<16x384xf32>
    %9 = math.exp %8 : vector<16x384xf32>
    %cst_4 = arith.constant 1.000000e+00 : f32
    %10 = vector.broadcast %cst_4 : f32 to vector<16x384xf32>
    %11 = arith.addf %10, %9 : vector<16x384xf32>
    %12 = arith.divf %10, %11 : vector<16x384xf32>
    %13 = arith.mulf %6, %12 : vector<16x384xf32>
    %14 = arith.mulf %13, %7 : vector<16x384xf32>
    %c0_5 = arith.constant 0 : index
    %c0_6 = arith.constant 0 : index
    %15 = vector.load %arg5[%c0_5, %c0_6] : memref<16x256xf32, #tpu.memory_space<vmem>>, vector<16x256xf32>
    %c0_7 = arith.constant 0 : index
    %c0_8 = arith.constant 0 : index
    %16 = vector.load %arg4[%c0_7, %c0_8] : memref<384x256xf32, #tpu.memory_space<vmem>>, vector<384x256xf32>
    %cst_9 = arith.constant dense<0.000000e+00> : vector<16x256xf32>
    %17 = tpu.matmul %14, %16, %cst_9 {dimension_numbers = #tpu.dot_dimension_numbers<[1], [0], [0], [1], [0, 0, 1, 1], [], []>} : vector<16x384xf32>, vector<384x256xf32>, vector<16x256xf32> -> vector<16x256xf32>
    %18 = arith.addf %15, %17 : vector<16x256xf32>
    %c0_10 = arith.constant 0 : index
    %c0_11 = arith.constant 0 : index
    %19 = vector.load %arg5[%c0_10, %c0_11] : memref<16x256xf32, #tpu.memory_space<vmem>>, vector<16x256xf32>
    tpu.vector_store %arg5[%c0_10, %c0_11], %18 {strides = array<i32>} : memref<16x256xf32, #tpu.memory_space<vmem>>, vector<16x256xf32>,
    return
  }
  func.func @transform_0(%arg0: i32, %arg1: i32) -> (i32, i32) {
    %c0_i32 = arith.constant 0 : i32
    %c0_i32_0 = arith.constant 0 : i32
    return %arg0, %c0_i32 : i32, i32
  }
  func.func @transform_1(%arg0: i32, %arg1: i32) -> (i32, i32) {
    %c0_i32 = arith.constant 0 : i32
    %c0_i32_0 = arith.constant 0 : i32
    return %c0_i32, %arg1 : i32, i32
  }
  func.func @transform_2(%arg0: i32, %arg1: i32) -> (i32, i32) {
    %c0_i32 = arith.constant 0 : i32
    %c0_i32_0 = arith.constant 0 : i32
    return %arg1, %c0_i32 : i32, i32
  }
  func.func @transform_3(%arg0: i32, %arg1: i32) -> (i32, i32) {
    %c0_i32 = arith.constant 0 : i32
    %c0_i32_0 = arith.constant 0 : i32
    return %arg0, %c0_i32 : i32, i32
  }
}

</mosaic_0001>

<llo_original>
// kernel: tpu_custom_call.1
$region0: #{tpu_custom_call.1}
  #allocation0 [shape = 'u32[]', space=smem, size = 0x4, offset = 0x4, fixed_abs, tag = 'smem constant byte address 0x4 - core index']
  #allocation1 [shape = 'u32[144,128]{1,0:T(1,128)}', space=vmem, size = 0x12000, scoped, tag = 'internal scratch']
  %s0 = inlined_call_operand.hbm [shape: f32[16,256], index: 0, kind: input, shape index: {}]
  %s1 = inlined_call_operand.hbm [shape: f32[256,1536], index: 1, kind: input, shape index: {}]
  %s2 = inlined_call_operand.hbm [shape: f32[768,256], index: 2, kind: input, shape index: {}]
  %s3 = inlined_call_operand.hbm [shape: f32[16,256], index: 3, kind: output, shape index: {}]
  %s4 = sld [smem:[#allocation0]]
  $region61: #{tpu_custom_call.1} parent=0
    _
  %s6 = ssub.s32 1, %s4
  %s7 = scalar_select 0, %s6, %s4
  $region1: #{tpu_custom_call.1} parent=0
    #allocation2 [shape = 'u8[16384]{0}', space=vmem, size = 0x4000, scoped, tag = 'input window, operand 0, single buffered']
    #allocation3 [shape = 's32[2]{0}', space=sflag, size = 0x8, scoped, tag = 'scoped memory for tpu_custom_call.1']
    #allocation4 [shape = 's32[2]{0}', space=sflag, size = 0x8, scoped, tag = 'scoped memory for tpu_custom_call.1']
    #allocation5 [shape = 'u8[1572864]{0}', space=vmem, size = 0x180000, scoped, tag = 'input window, operand 1']
    #allocation6 [shape = 's32[2]{0}', space=sflag, size = 0x8, scoped, tag = 'scoped memory for tpu_custom_call.1']
    #allocation7 [shape = 'u8[786432]{0}', space=vmem, size = 0xc0000, scoped, tag = 'input window, operand 2']
    #allocation8 [shape = 'u8[16384]{0}', space=vmem, size = 0x4000, scoped, tag = 'output window, operand 0, single buffered']
    %8 = vsyncpa [#allocation3], 0
    %9 = vsyncpa [#allocation6], 0
    %s10 = scalar_lea.sflag [#allocation6], 1
    %11 = vsyncpa %s10, 0
    %12 = vsyncpa [#allocation4], 0
    loop: start=0, step=1, limit=4
    $region2: #{tpu_custom_call.1} parent=1 // loop_pre_header
      _
    $region3: #{tpu_custom_call.1} parent=1 // loop_header
      %s14 = sphi 0, %s18
      %p15 = scmp.ge.s32.totalorder %s14, 4
      %s21 = sphi 0, %s33
      %s22 = sphi 0, %s29
      %s23 = sphi 0, %s21
      %s24 = sphi 0, %s22
      %s25 = sphi 0, %s23
      %s26 = sphi 0, %s24
      %s36 = sphi 0, %s38
      %s39 = sphi 0, %s36
      %s40 = sphi 0, %s39
      %s56 = sphi 0, %s40
      %s62 = sphi 0, %s64
      %s65 = sphi 0, %s62
      %s66 = sphi 0, %s65
      %s82 = sphi 0, %s66
      %s88 = sphi 0, %s90
      %s91 = sphi 0, %s88
      %s92 = sphi 0, %s91
      %s108 = sphi 0, %s92
      %s114 = sphi 0, %s116
      %s117 = sphi 0, %s114
      %s118 = sphi 0, %s117
      %s134 = sphi 0, %s118
    $region4: #{tpu_custom_call.1} parent=1 // loop_header_branch
      %17 = sbr.rel (%p15) target = $region8
    $region5: #{tpu_custom_call.1} parent=1 // loop_body
      %s19 = ssub.s32 %s14, 1
      %s20 = ssub.s32 %s14, 2
      %s27 = sadd.s32 1, %s22
      %p28 = scmp.ge.s32.totalorder %s27, 2
      %s29 = scalar_select %p28, 0, %s27
      %s30 = sadd.s32 1, %s21
      %s31 = scalar_select %p28, %s30, %s21
      %p32 = scmp.ge.s32.totalorder %s31, 1
      %s33 = scalar_select %p32, 0, %s31
      %s34 = ssub.s32 %s21, %s33
      %p35 = scmp.eq.s32.totalorder %s34, 0
      %s37 = sadd.s32 %s36, 1
      %s38 = scalar_select %p35, %s36, %s37
      %p41 = pneg %p35
      %p42 = scmp.eq.s32.totalorder %s14, 1
      %p43 = por %p41, %p42
      %p44 = scmp.ne.s32.totalorder %s36, %s39
      %p45 = scmp.eq.s32.totalorder %s14, 0
      %p46 = por %p44, %p45
      %p47 = scmp.ne.s32.totalorder %s36, %s39
      %p48 = scmp.eq.s32.totalorder %s19, 1
      %p49 = por %p47, %p48
      %p50 = scmp.ne.s32.totalorder %s39, %s40
      %p51 = scmp.eq.s32.totalorder %s19, 0
      %p52 = por %p50, %p51
      %p53 = scmp.ne.s32.totalorder %s39, %s40
      %p54 = scmp.eq.s32.totalorder %s20, 1
      %p55 = por %p53, %p54
      %p57 = scmp.ne.s32.totalorder %s40, %s56
      %p58 = scmp.eq.s32.totalorder %s20, 0
      %p59 = por %p57, %p58
      %s60 = ssub.s32 %s22, %s29
      %p61 = scmp.eq.s32.totalorder %s60, 0
      %s63 = sadd.s32 %s62, 1
      %s64 = scalar_select %p61, %s62, %s63
      %p67 = pneg %p61
      %p68 = scmp.eq.s32.totalorder %s14, 1
      %p69 = por %p67, %p68
      %p70 = scmp.ne.s32.totalorder %s62, %s65
      %p71 = scmp.eq.s32.totalorder %s14, 0
      %p72 = por %p70, %p71
      %p73 = scmp.ne.s32.totalorder %s62, %s65
      %p74 = scmp.eq.s32.totalorder %s19, 1
      %p75 = por %p73, %p74
      %p76 = scmp.ne.s32.totalorder %s65, %s66
      %p77 = scmp.eq.s32.totalorder %s19, 0
      %p78 = por %p76, %p77
      %p79 = scmp.ne.s32.totalorder %s65, %s66
      %p80 = scmp.eq.s32.totalorder %s20, 1
      %p81 = por %p79, %p80
      %p83 = scmp.ne.s32.totalorder %s66, %s82
      %p84 = scmp.eq.s32.totalorder %s20, 0
      %p85 = por %p83, %p84
      %s86 = ssub.s32 %s22, %s29
      %p87 = scmp.eq.s32.totalorder %s86, 0
      %s89 = sadd.s32 %s88, 1
      %s90 = scalar_select %p87, %s88, %s89
      %p93 = pneg %p87
      %p94 = scmp.eq.s32.totalorder %s14, 1
      %p95 = por %p93, %p94
      %p96 = scmp.ne.s32.totalorder %s88, %s91
      %p97 = scmp.eq.s32.totalorder %s14, 0
      %p98 = por %p96, %p97
      %p99 = scmp.ne.s32.totalorder %s88, %s91
      %p100 = scmp.eq.s32.totalorder %s19, 1
      %p101 = por %p99, %p100
      %p102 = scmp.ne.s32.totalorder %s91, %s92
      %p103 = scmp.eq.s32.totalorder %s19, 0
      %p104 = por %p102, %p103
      %p105 = scmp.ne.s32.totalorder %s91, %s92
      %p106 = scmp.eq.s32.totalorder %s20, 1
      %p107 = por %p105, %p106
      %p109 = scmp.ne.s32.totalorder %s92, %s108
      %p110 = scmp.eq.s32.totalorder %s20, 0
      %p111 = por %p109, %p110
      %s112 = ssub.s32 %s21, %s33
      %p113 = scmp.eq.s32.totalorder %s112, 0
      %s115 = sadd.s32 %s114, 1
      %s116 = scalar_select %p113, %s114, %s115
      %p119 = pneg %p113
      %p120 = scmp.eq.s32.totalorder %s14, 1
      %p121 = por %p119, %p120
      %p122 = scmp.ne.s32.totalorder %s114, %s117
      %p123 = scmp.eq.s32.totalorder %s14, 0
      %p124 = por %p122, %p123
      %p125 = scmp.ne.s32.totalorder %s114, %s117
      %p126 = scmp.eq.s32.totalorder %s19, 1
      %p127 = por %p125, %p126
      %p128 = scmp.ne.s32.totalorder %s117, %s118
      %p129 = scmp.eq.s32.totalorder %s19, 0
      %p130 = por %p128, %p129
      %p131 = scmp.ne.s32.totalorder %s117, %s118
      %p132 = scmp.eq.s32.totalorder %s20, 1
      %p133 = por %p131, %p132
      %p135 = scmp.ne.s32.totalorder %s118, %s134
      %p136 = scmp.eq.s32.totalorder %s20, 0
      %p137 = por %p135, %p136
      %p138 = scmp.le.s32.totalorder 1, %s14
      %p139 = scmp.lt.s32.totalorder %s14, 3
      %p140 = pnand %p138, %p139
      %p141 = pneg %p140
      // Predicated region
      $region9: #{tpu_custom_call.1} parent=5 // pred_check
        _
      $region10: #{tpu_custom_call.1} parent=5 // pred_check_branch
        %143 = sbr.rel (%p140) target = $region12
      $region11: #{tpu_custom_call.1} parent=5 // pred_region
        %s144 = ssub.s32 %s14, 1
        // Predicated region
        $region13: #{tpu_custom_call.1} parent=11 // pred_check
          %p145 = pneg %p52
        $region14: #{tpu_custom_call.1} parent=11 // pred_check_branch
          %147 = sbr.rel (%p145) target = $region16
        $region15: #{tpu_custom_call.1} parent=11 // pred_region
          %s148 = smul.u32 2, %s23
          %s150 = ssub.s32 512, 512
          %151 = vsyncadd [#allocation3], %s150
          %s152 = smul.addr %s148, 2
          %s153 = smul.addr %s152, 128
          %s154 = scalar_lea.hbm %s0, %s153
          %s155 = sshll.u32 [#allocation2], 4
          %s156 = int_to_ptr.vmem [resolvable:$true] %s155
          %161 = dma.hbm_to_vmem [thread:$0]  %s154, 512, %s156, [#allocation3], 256, 256, 16
        $region16: #{tpu_custom_call.1} parent=11 // pred_fallthru
          _
      $region12: #{tpu_custom_call.1} parent=5 // pred_fallthru
        _
      %p162 = scmp.lt.s32.totalorder %s14, 2
      // Predicated region
      $region17: #{tpu_custom_call.1} parent=5 // pred_check
        %p163 = pneg %p162
      $region18: #{tpu_custom_call.1} parent=5 // pred_check_branch
        %165 = sbr.rel (%p163) target = $region20
      $region19: #{tpu_custom_call.1} parent=5 // pred_region
        // Predicated region
        $region21: #{tpu_custom_call.1} parent=19 // pred_check
          %p166 = pneg %p72
        $region22: #{tpu_custom_call.1} parent=19 // pred_check_branch
          %168 = sbr.rel (%p166) target = $region24
        $region23: #{tpu_custom_call.1} parent=19 // pred_region
          %s169 = sand.u32 %s14, 1
          %s170 = scalar_lea.sflag [#allocation6], %s169
          %s171 = sand.u32 %s62, 1
          %s172 = smul.addr %s171, 1536
          %s173 = scalar_lea.vmem [#allocation5], %s172
          %s174 = smul.u32 6, %s22
          %s176 = ssub.s32 24576, 24576
          %177 = vsyncadd %s170, %s176
          %s178 = smul.addr %s174, 128
          %s179 = scalar_lea.hbm %s1, %s178
          %s180 = sshll.u32 %s173, 4
          %s181 = int_to_ptr.vmem [resolvable:$true] %s180
          %186 = dma.hbm_to_vmem [thread:$0]  %s179, 24576, %s181, %s170, 1536, 768, 48
        $region24: #{tpu_custom_call.1} parent=19 // pred_fallthru
          _
        // Predicated region
        $region25: #{tpu_custom_call.1} parent=19 // pred_check
          %p187 = pneg %p98
        $region26: #{tpu_custom_call.1} parent=19 // pred_check_branch
          %189 = sbr.rel (%p187) target = $region28
        $region27: #{tpu_custom_call.1} parent=19 // pred_region
          %s190 = sand.u32 %s14, 1
          %s191 = scalar_lea.sflag [#allocation6], %s190
          %s192 = sand.u32 %s88, 1
          %s193 = smul.addr %s192, 768
          %s194 = scalar_lea.vmem [#allocation7], %s193
          %s195 = smul.u32 48, %s22
          %s197 = ssub.s32 12288, 12288
          %198 = vsyncadd %s191, %s197
          %s199 = smul.addr %s195, 2
          %s200 = smul.addr %s199, 128
          %s201 = scalar_lea.hbm %s2, %s200
          %s202 = sshll.u32 %s194, 4
          %s203 = int_to_ptr.vmem [resolvable:$true] %s202
          %208 = dma.hbm_to_vmem [thread:$0]  %s201, 12288, %s203, %s191, 256, 256, 16
        $region28: #{tpu_custom_call.1} parent=19 // pred_fallthru
          _
      $region20: #{tpu_custom_call.1} parent=5 // pred_fallthru
        _
      %p209 = scmp.le.s32.totalorder 1, %s14
      %p210 = scmp.lt.s32.totalorder %s14, 3
      %p211 = pnand %p209, %p210
      %p212 = pneg %p211
      // Predicated region
      $region29: #{tpu_custom_call.1} parent=5 // pred_check
        _
      $region30: #{tpu_custom_call.1} parent=5 // pred_check_branch
        %214 = sbr.rel (%p211) target = $region32
      $region31: #{tpu_custom_call.1} parent=5 // pred_region
        %s215 = ssub.s32 %s14, 1
        // Predicated region
        $region33: #{tpu_custom_call.1} parent=31 // pred_check
          %p216 = pneg %p52
        $region34: #{tpu_custom_call.1} parent=31 // pred_check_branch
          %218 = sbr.rel (%p216) target = $region36
        $region35: #{tpu_custom_call.1} parent=31 // pred_region
          %219 = dma.done [#allocation3], 512
        $region36: #{tpu_custom_call.1} parent=31 // pred_fallthru
          _
        %s220 = sand.u32 %s19, 1
        %s221 = scalar_lea.sflag [#allocation6], %s220
        %s222 = sand.u32 %s65, 1
        %s223 = smul.addr %s222, 1536
        %s224 = scalar_lea.vmem [#allocation5], %s223
        // Predicated region
        $region37: #{tpu_custom_call.1} parent=31 // pred_check
          %p225 = pneg %p78
        $region38: #{tpu_custom_call.1} parent=31 // pred_check_branch
          %227 = sbr.rel (%p225) target = $region40
        $region39: #{tpu_custom_call.1} parent=31 // pred_region
          %228 = dma.done %s221, 24576
        $region40: #{tpu_custom_call.1} parent=31 // pred_fallthru
          _
        %s229 = sand.u32 %s19, 1
        %s230 = scalar_lea.sflag [#allocation6], %s229
        %s231 = sand.u32 %s91, 1
        %s232 = smul.addr %s231, 768
        %s233 = scalar_lea.vmem [#allocation7], %s232
        // Predicated region
        $region41: #{tpu_custom_call.1} parent=31 // pred_check
          %p234 = pneg %p104
        $region42: #{tpu_custom_call.1} parent=31 // pred_check_branch
          %236 = sbr.rel (%p234) target = $region44
        $region43: #{tpu_custom_call.1} parent=31 // pred_region
          %237 = dma.done %s230, 12288
        $region44: #{tpu_custom_call.1} parent=31 // pred_fallthru
          _
        %p238 = pneg %p52
        %p239 = pneg %p49
        %s240 = sand.u32 %s19, 1
        %s241 = scalar_lea.sflag [#allocation6], %s240
        %s242 = sand.u32 %s65, 1
        %s243 = smul.addr %s242, 1536
        %s244 = scalar_lea.vmem [#allocation5], %s243
        %p245 = pneg %p78
        %p246 = pneg %p75
        %s247 = sand.u32 %s19, 1
        %s248 = scalar_lea.sflag [#allocation6], %s247
        %s249 = sand.u32 %s91, 1
        %s250 = smul.addr %s249, 768
        %s251 = scalar_lea.vmem [#allocation7], %s250
        %p252 = pneg %p104
        %p253 = pneg %p101
        %p254 = pneg %p130
        %p255 = pneg %p127
        %s256 = smul.u32 2, %s23
        %s257 = smul.u32 6, %s24
        %s258 = smul.u32 48, %s24
        %s259 = smul.u32 2, %s23
        %p260 = scmp.eq.s32.totalorder %s24, 0
        // Predicated region
        $region45: #{tpu_custom_call.1} parent=31 // pred_check
          %p261 = pneg %p260
        $region46: #{tpu_custom_call.1} parent=31 // pred_check_branch
          %263 = sbr.rel (%p261) target = $region48
        $region47: #{tpu_custom_call.1} parent=31 // pred_region
          %264 = vst [vmem:[#allocation8] sm:$0xff] 0.0
          %265 = vst [vmem:[#allocation8 + $0x8] sm:$0xff] 0.0
          %266 = vst [vmem:[#allocation8 + $0x10] sm:$0xff] 0.0
          %267 = vst [vmem:[#allocation8 + $0x18] sm:$0xff] 0.0
        $region48: #{tpu_custom_call.1} parent=31 // pred_fallthru
          _
        %v268 = vld [vmem:[#allocation2] sm:$0xff]
        %v269 = vld [vmem:[#allocation2 + $0x8] sm:$0xff]
        %v270 = vld [vmem:[#allocation2 + $0x10] sm:$0xff]
        %v271 = vld [vmem:[#allocation2 + $0x18] sm:$0xff]
        %v272 = vld [vmem:[%s224] sm:$0xff]
        %v273 = vld [vmem:[%s224 + $0x8] sm:$0xff]
        %v274 = vld [vmem:[%s224 + $0x10] sm:$0xff]
        %v275 = vld [vmem:[%s224 + $0x18] sm:$0xff]
        %v276 = vld [vmem:[%s224 + $0x20] sm:$0xff]
        %v277 = vld [vmem:[%s224 + $0x28] sm:$0xff]
        %v278 = vld [vmem:[%s224 + $0x30] sm:$0xff]
        %v279 = vld [vmem:[%s224 + $0x38] sm:$0xff]
        %v280 = vld [vmem:[%s224 + $0x40] sm:$0xff]
        %v281 = vld [vmem:[%s224 + $0x48] sm:$0xff]
        %v282 = vld [vmem:[%s224 + $0x50] sm:$0xff]
        %v283 = vld [vmem:[%s224 + $0x58] sm:$0xff]
        %v284 = vld [vmem:[%s224 + $0x60] sm:$0xff]
        %v285 = vld [vmem:[%s224 + $0x68] sm:$0xff]
        %v286 = vld [vmem:[%s224 + $0x70] sm:$0xff]
        %v287 = vld [vmem:[%s224 + $0x78] sm:$0xff]
        %v288 = vld [vmem:[%s224 + $0x80] sm:$0xff]
        %v289 = vld [vmem:[%s224 + $0x88] sm:$0xff]
        %v290 = vld [vmem:[%s224 + $0x90] sm:$0xff]
        %v291 = vld [vmem:[%s224 + $0x98] sm:$0xff]
        %v292 = vld [vmem:[%s224 + $0xa0] sm:$0xff]
        %v293 = vld [vmem:[%s224 + $0xa8] sm:$0xff]
        %v294 = vld [vmem:[%s224 + $0xb0] sm:$0xff]
        %v295 = vld [vmem:[%s224 + $0xb8] sm:$0xff]
        %v296 = vld [vmem:[%s224 + $0xc0] sm:$0xff]
        %v297 = vld [vmem:[%s224 + $0xc8] sm:$0xff]
        %v298 = vld [vmem:[%s224 + $0xd0] sm:$0xff]
        %v299 = vld [vmem:[%s224 + $0xd8] sm:$0xff]
        %v300 = vld [vmem:[%s224 + $0xe0] sm:$0xff]
        %v301 = vld [vmem:[%s224 + $0xe8] sm:$0xff]
        %v302 = vld [vmem:[%s224 + $0xf0] sm:$0xff]
        %v303 = vld [vmem:[%s224 + $0xf8] sm:$0xff]
        %v304 = vld [vmem:[%s224 + $0x100] sm:$0xff]
        %v305 = vld [vmem:[%s224 + $0x108] sm:$0xff]
        %v306 = vld [vmem:[%s224 + $0x110] sm:$0xff]
        %v307 = vld [vmem:[%s224 + $0x118] sm:$0xff]
        %v308 = vld [vmem:[%s224 + $0x120] sm:$0xff]
        %v309 = vld [vmem:[%s224 + $0x128] sm:$0xff]
        %v310 = vld [vmem:[%s224 + $0x130] sm:$0xff]
        %v311 = vld [vmem:[%s224 + $0x138] sm:$0xff]
        %v312 = vld [vmem:[%s224 + $0x140] sm:$0xff]
        %v313 = vld [vmem:[%s224 + $0x148] sm:$0xff]
        %v314 = vld [vmem:[%s224 + $0x150] sm:$0xff]
        %v315 = vld [vmem:[%s224 + $0x158] sm:$0xff]
        %v316 = vld [vmem:[%s224 + $0x160] sm:$0xff]
        %v317 = vld [vmem:[%s224 + $0x168] sm:$0xff]
        %v318 = vld [vmem:[%s224 + $0x170] sm:$0xff]
        %v319 = vld [vmem:[%s224 + $0x178] sm:$0xff]
        %v320 = vld [vmem:[%s224 + $0x180] sm:$0xff]
        %v321 = vld [vmem:[%s224 + $0x188] sm:$0xff]
        %v322 = vld [vmem:[%s224 + $0x190] sm:$0xff]
        %v323 = vld [vmem:[%s224 + $0x198] sm:$0xff]
        %v324 = vld [vmem:[%s224 + $0x1a0] sm:$0xff]
        %v325 = vld [vmem:[%s224 + $0x1a8] sm:$0xff]
        %v326 = vld [vmem:[%s224 + $0x1b0] sm:$0xff]
        %v327 = vld [vmem:[%s224 + $0x1b8] sm:$0xff]
        %v328 = vld [vmem:[%s224 + $0x1c0] sm:$0xff]
        %v329 = vld [vmem:[%s224 + $0x1c8] sm:$0xff]
        %v330 = vld [vmem:[%s224 + $0x1d0] sm:$0xff]
        %v331 = vld [vmem:[%s224 + $0x1d8] sm:$0xff]
        %v332 = vld [vmem:[%s224 + $0x1e0] sm:$0xff]
        %v333 = vld [vmem:[%s224 + $0x1e8] sm:$0xff]
        %v334 = vld [vmem:[%s224 + $0x1f0] sm:$0xff]
        %v335 = vld [vmem:[%s224 + $0x1f8] sm:$0xff]
        %v336 = vld [vmem:[%s224 + $0x200] sm:$0xff]
        %v337 = vld [vmem:[%s224 + $0x208] sm:$0xff]
        %v338 = vld [vmem:[%s224 + $0x210] sm:$0xff]
        %v339 = vld [vmem:[%s224 + $0x218] sm:$0xff]
        %v340 = vld [vmem:[%s224 + $0x220] sm:$0xff]
        %v341 = vld [vmem:[%s224 + $0x228] sm:$0xff]
        %v342 = vld [vmem:[%s224 + $0x230] sm:$0xff]
        %v343 = vld [vmem:[%s224 + $0x238] sm:$0xff]
        %v344 = vld [vmem:[%s224 + $0x240] sm:$0xff]
        %v345 = vld [vmem:[%s224 + $0x248] sm:$0xff]
        %v346 = vld [vmem:[%s224 + $0x250] sm:$0xff]
        %v347 = vld [vmem:[%s224 + $0x258] sm:$0xff]
        %v348 = vld [vmem:[%s224 + $0x260] sm:$0xff]
        %v349 = vld [vmem:[%s224 + $0x268] sm:$0xff]
        %v350 = vld [vmem:[%s224 + $0x270] sm:$0xff]
        %v351 = vld [vmem:[%s224 + $0x278] sm:$0xff]
        %v352 = vld [vmem:[%s224 + $0x280] sm:$0xff]
        %v353 = vld [vmem:[%s224 + $0x288] sm:$0xff]
        %v354 = vld [vmem:[%s224 + $0x290] sm:$0xff]
        %v355 = vld [vmem:[%s224 + $0x298] sm:$0xff]
        %v356 = vld [vmem:[%s224 + $0x2a0] sm:$0xff]
        %v357 = vld [vmem:[%s224 + $0x2a8] sm:$0xff]
        %v358 = vld [vmem:[%s224 + $0x2b0] sm:$0xff]
        %v359 = vld [vmem:[%s224 + $0x2b8] sm:$0xff]
        %v360 = vld [vmem:[%s224 + $0x2c0] sm:$0xff]
        %v361 = vld [vmem:[%s224 + $0x2c8] sm:$0xff]
        %v362 = vld [vmem:[%s224 + $0x2d0] sm:$0xff]
        %v363 = vld [vmem:[%s224 + $0x2d8] sm:$0xff]
        %v364 = vld [vmem:[%s224 + $0x2e0] sm:$0xff]
        %v365 = vld [vmem:[%s224 + $0x2e8] sm:$0xff]
        %v366 = vld [vmem:[%s224 + $0x2f0] sm:$0xff]
        %v367 = vld [vmem:[%s224 + $0x2f8] sm:$0xff]
        %v368 = vld [vmem:[%s224 + $0x300] sm:$0xff]
        %v369 = vld [vmem:[%s224 + $0x308] sm:$0xff]
        %v370 = vld [vmem:[%s224 + $0x310] sm:$0xff]
        %v371 = vld [vmem:[%s224 + $0x318] sm:$0xff]
        %v372 = vld [vmem:[%s224 + $0x320] sm:$0xff]
        %v373 = vld [vmem:[%s224 + $0x328] sm:$0xff]
        %v374 = vld [vmem:[%s224 + $0x330] sm:$0xff]
        %v375 = vld [vmem:[%s224 + $0x338] sm:$0xff]
        %v376 = vld [vmem:[%s224 + $0x340] sm:$0xff]
        %v377 = vld [vmem:[%s224 + $0x348] sm:$0xff]
        %v378 = vld [vmem:[%s224 + $0x350] sm:$0xff]
        %v379 = vld [vmem:[%s224 + $0x358] sm:$0xff]
        %v380 = vld [vmem:[%s224 + $0x360] sm:$0xff]
        %v381 = vld [vmem:[%s224 + $0x368] sm:$0xff]
        %v382 = vld [vmem:[%s224 + $0x370] sm:$0xff]
        %v383 = vld [vmem:[%s224 + $0x378] sm:$0xff]
        %v384 = vld [vmem:[%s224 + $0x380] sm:$0xff]
        %v385 = vld [vmem:[%s224 + $0x388] sm:$0xff]
        %v386 = vld [vmem:[%s224 + $0x390] sm:$0xff]
        %v387 = vld [vmem:[%s224 + $0x398] sm:$0xff]
        %v388 = vld [vmem:[%s224 + $0x3a0] sm:$0xff]
        %v389 = vld [vmem:[%s224 + $0x3a8] sm:$0xff]
        %v390 = vld [vmem:[%s224 + $0x3b0] sm:$0xff]
        %v391 = vld [vmem:[%s224 + $0x3b8] sm:$0xff]
        %v392 = vld [vmem:[%s224 + $0x3c0] sm:$0xff]
        %v393 = vld [vmem:[%s224 + $0x3c8] sm:$0xff]
        %v394 = vld [vmem:[%s224 + $0x3d0] sm:$0xff]
        %v395 = vld [vmem:[%s224 + $0x3d8] sm:$0xff]
        %v396 = vld [vmem:[%s224 + $0x3e0] sm:$0xff]
        %v397 = vld [vmem:[%s224 + $0x3e8] sm:$0xff]
        %v398 = vld [vmem:[%s224 + $0x3f0] sm:$0xff]
        %v399 = vld [vmem:[%s224 + $0x3f8] sm:$0xff]
        %v400 = vld [vmem:[%s224 + $0x400] sm:$0xff]
        %v401 = vld [vmem:[%s224 + $0x408] sm:$0xff]
        %v402 = vld [vmem:[%s224 + $0x410] sm:$0xff]
        %v403 = vld [vmem:[%s224 + $0x418] sm:$0xff]
        %v404 = vld [vmem:[%s224 + $0x420] sm:$0xff]
        %v405 = vld [vmem:[%s224 + $0x428] sm:$0xff]
        %v406 = vld [vmem:[%s224 + $0x430] sm:$0xff]
        %v407 = vld [vmem:[%s224 + $0x438] sm:$0xff]
        %v408 = vld [vmem:[%s224 + $0x440] sm:$0xff]
        %v409 = vld [vmem:[%s224 + $0x448] sm:$0xff]
        %v410 = vld [vmem:[%s224 + $0x450] sm:$0xff]
        %v411 = vld [vmem:[%s224 + $0x458] sm:$0xff]
        %v412 = vld [vmem:[%s224 + $0x460] sm:$0xff]
        %v413 = vld [vmem:[%s224 + $0x468] sm:$0xff]
        %v414 = vld [vmem:[%s224 + $0x470] sm:$0xff]
        %v415 = vld [vmem:[%s224 + $0x478] sm:$0xff]
        %v416 = vld [vmem:[%s224 + $0x480] sm:$0xff]
        %v417 = vld [vmem:[%s224 + $0x488] sm:$0xff]
        %v418 = vld [vmem:[%s224 + $0x490] sm:$0xff]
        %v419 = vld [vmem:[%s224 + $0x498] sm:$0xff]
        %v420 = vld [vmem:[%s224 + $0x4a0] sm:$0xff]
        %v421 = vld [vmem:[%s224 + $0x4a8] sm:$0xff]
        %v422 = vld [vmem:[%s224 + $0x4b0] sm:$0xff]
        %v423 = vld [vmem:[%s224 + $0x4b8] sm:$0xff]
        %v424 = vld [vmem:[%s224 + $0x4c0] sm:$0xff]
        %v425 = vld [vmem:[%s224 + $0x4c8] sm:$0xff]
        %v426 = vld [vmem:[%s224 + $0x4d0] sm:$0xff]
        %v427 = vld [vmem:[%s224 + $0x4d8] sm:$0xff]
        %v428 = vld [vmem:[%s224 + $0x4e0] sm:$0xff]
        %v429 = vld [vmem:[%s224 + $0x4e8] sm:$0xff]
        %v430 = vld [vmem:[%s224 + $0x4f0] sm:$0xff]
        %v431 = vld [vmem:[%s224 + $0x4f8] sm:$0xff]
        %v432 = vld [vmem:[%s224 + $0x500] sm:$0xff]
        %v433 = vld [vmem:[%s224 + $0x508] sm:$0xff]
        %v434 = vld [vmem:[%s224 + $0x510] sm:$0xff]
        %v435 = vld [vmem:[%s224 + $0x518] sm:$0xff]
        %v436 = vld [vmem:[%s224 + $0x520] sm:$0xff]
        %v437 = vld [vmem:[%s224 + $0x528] sm:$0xff]
        %v438 = vld [vmem:[%s224 + $0x530] sm:$0xff]
        %v439 = vld [vmem:[%s224 + $0x538] sm:$0xff]
        %v440 = vld [vmem:[%s224 + $0x540] sm:$0xff]
        %v441 = vld [vmem:[%s224 + $0x548] sm:$0xff]
        %v442 = vld [vmem:[%s224 + $0x550] sm:$0xff]
        %v443 = vld [vmem:[%s224 + $0x558] sm:$0xff]
        %v444 = vld [vmem:[%s224 + $0x560] sm:$0xff]
        %v445 = vld [vmem:[%s224 + $0x568] sm:$0xff]
        %v446 = vld [vmem:[%s224 + $0x570] sm:$0xff]
        %v447 = vld [vmem:[%s224 + $0x578] sm:$0xff]
        %v448 = vld [vmem:[%s224 + $0x580] sm:$0xff]
        %v449 = vld [vmem:[%s224 + $0x588] sm:$0xff]
        %v450 = vld [vmem:[%s224 + $0x590] sm:$0xff]
        %v451 = vld [vmem:[%s224 + $0x598] sm:$0xff]
        %v452 = vld [vmem:[%s224 + $0x5a0] sm:$0xff]
        %v453 = vld [vmem:[%s224 + $0x5a8] sm:$0xff]
        %v454 = vld [vmem:[%s224 + $0x5b0] sm:$0xff]
        %v455 = vld [vmem:[%s224 + $0x5b8] sm:$0xff]
        %v456 = vld [vmem:[%s224 + $0x5c0] sm:$0xff]
        %v457 = vld [vmem:[%s224 + $0x5c8] sm:$0xff]
        %v458 = vld [vmem:[%s224 + $0x5d0] sm:$0xff]
        %v459 = vld [vmem:[%s224 + $0x5d8] sm:$0xff]
        %v460 = vld [vmem:[%s224 + $0x5e0] sm:$0xff]
        %v461 = vld [vmem:[%s224 + $0x5e8] sm:$0xff]
        %v462 = vld [vmem:[%s224 + $0x5f0] sm:$0xff]
        %v463 = vld [vmem:[%s224 + $0x5f8] sm:$0xff]
        %464 = vmatprep.subr.mxu0 %v363
        %465 = vmatpush1.msra.mxu0 %v362
        %466 = vmatprep.subr.mxu0 %v357
        %467 = vmatpush1.msra.mxu0 %v356
        %468 = vmatprep.subr.mxu0 %v351
        %469 = vmatpush1.msra.mxu0 %v350
        %470 = vmatprep.subr.mxu0 %v345
        %471 = vmatpush1.msra.mxu0 %v344
        %472 = vmatprep.subr.mxu0 %v339
        %473 = vmatpush1.msra.mxu0 %v338
        %474 = vmatprep.subr.mxu0 %v333
        %475 = vmatpush1.msra.mxu0 %v332
        %476 = vmatprep.subr.mxu0 %v327
        %477 = vmatpush1.msra.mxu0 %v326
        %478 = vmatprep.subr.mxu0 %v321
        %479 = vmatpush1.msra.mxu0 %v320
        %480 = vmatprep.subr.mxu0 %v315
        %481 = vmatpush1.msra.mxu0 %v314
        %482 = vmatprep.subr.mxu0 %v309
        %483 = vmatpush1.msra.mxu0 %v308
        %484 = vmatprep.subr.mxu0 %v303
        %485 = vmatpush1.msra.mxu0 %v302
        %486 = vmatprep.subr.mxu0 %v297
        %487 = vmatpush1.msra.mxu0 %v296
        %488 = vmatprep.subr.mxu0 %v291
        %489 = vmatpush1.msra.mxu0 %v290
        %490 = vmatprep.subr.mxu0 %v285
        %491 = vmatpush1.msra.mxu0 %v284
        %492 = vmatprep.subr.mxu0 %v279
        %493 = vmatpush1.msra.mxu0 %v278
        %494 = vmatprep.subr.mxu0 %v273
        %495 = vmatpush1.msra.mxu0 %v272
        %496 = vmatprep.subr.mxu0 %v459
        %497 = vmatpush2.msra.mxu0 %v458
        %498 = vmatprep.subr.mxu0 %v453
        %499 = vmatpush2.msra.mxu0 %v452
        %500 = vmatprep.subr.mxu0 %v447
        %501 = vmatpush2.msra.mxu0 %v446
        %502 = vmatprep.subr.mxu0 %v441
        %503 = vmatpush2.msra.mxu0 %v440
        %504 = vmatprep.subr.mxu0 %v435
        %505 = vmatpush2.msra.mxu0 %v434
        %506 = vmatprep.subr.mxu0 %v429
        %507 = vmatpush2.msra.mxu0 %v428
        %508 = vmatprep.subr.mxu0 %v423
        %509 = vmatpush2.msra.mxu0 %v422
        %510 = vmatprep.subr.mxu0 %v417
        %511 = vmatpush2.msra.mxu0 %v416
        %512 = vmatprep.subr.mxu0 %v411
        %513 = vmatpush2.msra.mxu0 %v410
        %514 = vmatprep.subr.mxu0 %v405
        %515 = vmatpush2.msra.mxu0 %v404
        %516 = vmatprep.subr.mxu0 %v399
        %517 = vmatpush2.msra.mxu0 %v398
        %518 = vmatprep.subr.mxu0 %v393
        %519 = vmatpush2.msra.mxu0 %v392
        %520 = vmatprep.subr.mxu0 %v387
        %521 = vmatpush2.msra.mxu0 %v386
        %522 = vmatprep.subr.mxu0 %v381
        %523 = vmatpush2.msra.mxu0 %v380
        %524 = vmatprep.subr.mxu0 %v375
        %525 = vmatpush2.msra.mxu0 %v374
        %526 = vmatprep.subr.mxu0 %v369
        %527 = vmatpush2.msra.mxu0 %v368
        %528 = vmatprep.mubr.f32.mxu0 %v269
        %529 = vmatmul.mubr.f32.gmra.mxu0 %v268
        %v530 = vpop.f32.mrf.mxu0
        %v531 = vadd.f32 0.0, %v530
        %v532 = vpop.f32.mrf.mxu0
        %v533 = vadd.f32 0.0, %v532
        %534 = vmatprep.mubr.f32.mxu0 %v271
        %535 = vmatmul.mubr.f32.gmra.mxu0 %v270
        %v536 = vpop.f32.mrf.mxu0
        %v537 = vadd.f32 0.0, %v536
        %v538 = vpop.f32.mrf.mxu0
        %v539 = vadd.f32 0.0, %v538
        %540 = vdwg.mxu0
        %541 = vmatprep.subr.mxu0 %v365
        %542 = vmatpush1.msra.mxu0 %v364
        %543 = vmatprep.subr.mxu0 %v359
        %544 = vmatpush1.msra.mxu0 %v358
        %545 = vmatprep.subr.mxu0 %v353
        %546 = vmatpush1.msra.mxu0 %v352
        %547 = vmatprep.subr.mxu0 %v347
        %548 = vmatpush1.msra.mxu0 %v346
        %549 = vmatprep.subr.mxu0 %v341
        %550 = vmatpush1.msra.mxu0 %v340
        %551 = vmatprep.subr.mxu0 %v335
        %552 = vmatpush1.msra.mxu0 %v334
        %553 = vmatprep.subr.mxu0 %v329
        %554 = vmatpush1.msra.mxu0 %v328
        %555 = vmatprep.subr.mxu0 %v323
        %556 = vmatpush1.msra.mxu0 %v322
        %557 = vmatprep.subr.mxu0 %v317
        %558 = vmatpush1.msra.mxu0 %v316
        %559 = vmatprep.subr.mxu0 %v311
        %560 = vmatpush1.msra.mxu0 %v310
        %561 = vmatprep.subr.mxu0 %v305
        %562 = vmatpush1.msra.mxu0 %v304
        %563 = vmatprep.subr.mxu0 %v299
        %564 = vmatpush1.msra.mxu0 %v298
        %565 = vmatprep.subr.mxu0 %v293
        %566 = vmatpush1.msra.mxu0 %v292
        %567 = vmatprep.subr.mxu0 %v287
        %568 = vmatpush1.msra.mxu0 %v286
        %569 = vmatprep.subr.mxu0 %v281
        %570 = vmatpush1.msra.mxu0 %v280
        %571 = vmatprep.subr.mxu0 %v275
        %572 = vmatpush1.msra.mxu0 %v274
        %573 = vmatprep.subr.mxu0 %v461
        %574 = vmatpush2.msra.mxu0 %v460
        %575 = vmatprep.subr.mxu0 %v455
        %576 = vmatpush2.msra.mxu0 %v454
        %577 = vmatprep.subr.mxu0 %v449
        %578 = vmatpush2.msra.mxu0 %v448
        %579 = vmatprep.subr.mxu0 %v443
        %580 = vmatpush2.msra.mxu0 %v442
        %581 = vmatprep.subr.mxu0 %v437
        %582 = vmatpush2.msra.mxu0 %v436
        %583 = vmatprep.subr.mxu0 %v431
        %584 = vmatpush2.msra.mxu0 %v430
        %585 = vmatprep.subr.mxu0 %v425
        %586 = vmatpush2.msra.mxu0 %v424
        %587 = vmatprep.subr.mxu0 %v419
        %588 = vmatpush2.msra.mxu0 %v418
        %589 = vmatprep.subr.mxu0 %v413
        %590 = vmatpush2.msra.mxu0 %v412
        %591 = vmatprep.subr.mxu0 %v407
        %592 = vmatpush2.msra.mxu0 %v406
        %593 = vmatprep.subr.mxu0 %v401
        %594 = vmatpush2.msra.mxu0 %v400
        %595 = vmatprep.subr.mxu0 %v395
        %596 = vmatpush2.msra.mxu0 %v394
        %597 = vmatprep.subr.mxu0 %v389
        %598 = vmatpush2.msra.mxu0 %v388
        %599 = vmatprep.subr.mxu0 %v383
        %600 = vmatpush2.msra.mxu0 %v382
        %601 = vmatprep.subr.mxu0 %v377
        %602 = vmatpush2.msra.mxu0 %v376
        %603 = vmatprep.subr.mxu0 %v371
        %604 = vmatpush2.msra.mxu0 %v370
        %605 = vmatprep.mubr.f32.mxu0 %v269
        %606 = vmatmul.mubr.f32.gmra.mxu0 %v268
        %v607 = vpop.f32.mrf.mxu0
        %v608 = vadd.f32 0.0, %v607
        %v609 = vpop.f32.mrf.mxu0
        %v610 = vadd.f32 0.0, %v609
        %611 = vmatprep.mubr.f32.mxu0 %v271
        %612 = vmatmul.mubr.f32.gmra.mxu0 %v270
        %v613 = vpop.f32.mrf.mxu0
        %v614 = vadd.f32 0.0, %v613
        %v615 = vpop.f32.mrf.mxu0
        %v616 = vadd.f32 0.0, %v615
        %617 = vdwg.mxu0
        %618 = vmatprep.subr.mxu0 %v367
        %619 = vmatpush1.msra.mxu0 %v366
        %620 = vmatprep.subr.mxu0 %v361
        %621 = vmatpush1.msra.mxu0 %v360
        %622 = vmatprep.subr.mxu0 %v355
        %623 = vmatpush1.msra.mxu0 %v354
        %624 = vmatprep.subr.mxu0 %v349
        %625 = vmatpush1.msra.mxu0 %v348
        %626 = vmatprep.subr.mxu0 %v343
        %627 = vmatpush1.msra.mxu0 %v342
        %628 = vmatprep.subr.mxu0 %v337
        %629 = vmatpush1.msra.mxu0 %v336
        %630 = vmatprep.subr.mxu0 %v331
        %631 = vmatpush1.msra.mxu0 %v330
        %632 = vmatprep.subr.mxu0 %v325
        %633 = vmatpush1.msra.mxu0 %v324
        %634 = vmatprep.subr.mxu0 %v319
        %635 = vmatpush1.msra.mxu0 %v318
        %636 = vmatprep.subr.mxu0 %v313
        %637 = vmatpush1.msra.mxu0 %v312
        %638 = vmatprep.subr.mxu0 %v307
        %639 = vmatpush1.msra.mxu0 %v306
        %640 = vmatprep.subr.mxu0 %v301
        %641 = vmatpush1.msra.mxu0 %v300
        %642 = vmatprep.subr.mxu0 %v295
        %643 = vmatpush1.msra.mxu0 %v294
        %644 = vmatprep.subr.mxu0 %v289
        %645 = vmatpush1.msra.mxu0 %v288
        %646 = vmatprep.subr.mxu0 %v283
        %647 = vmatpush1.msra.mxu0 %v282
        %648 = vmatprep.subr.mxu0 %v277
        %649 = vmatpush1.msra.mxu0 %v276
        %650 = vmatprep.subr.mxu0 %v463
        %651 = vmatpush2.msra.mxu0 %v462
        %652 = vmatprep.subr.mxu0 %v457
        %653 = vmatpush2.msra.mxu0 %v456
        %654 = vmatprep.subr.mxu0 %v451
        %655 = vmatpush2.msra.mxu0 %v450
        %656 = vmatprep.subr.mxu0 %v445
        %657 = vmatpush2.msra.mxu0 %v444
        %658 = vmatprep.subr.mxu0 %v439
        %659 = vmatpush2.msra.mxu0 %v438
        %660 = vmatprep.subr.mxu0 %v433
        %661 = vmatpush2.msra.mxu0 %v432
        %662 = vmatprep.subr.mxu0 %v427
        %663 = vmatpush2.msra.mxu0 %v426
        %664 = vmatprep.subr.mxu0 %v421
        %665 = vmatpush2.msra.mxu0 %v420
        %666 = vmatprep.subr.mxu0 %v415
        %667 = vmatpush2.msra.mxu0 %v414
        %668 = vmatprep.subr.mxu0 %v409
        %669 = vmatpush2.msra.mxu0 %v408
        %670 = vmatprep.subr.mxu0 %v403
        %671 = vmatpush2.msra.mxu0 %v402
        %672 = vmatprep.subr.mxu0 %v397
        %673 = vmatpush2.msra.mxu0 %v396
        %674 = vmatprep.subr.mxu0 %v391
        %675 = vmatpush2.msra.mxu0 %v390
        %676 = vmatprep.subr.mxu0 %v385
        %677 = vmatpush2.msra.mxu0 %v384
        %678 = vmatprep.subr.mxu0 %v379
        %679 = vmatpush2.msra.mxu0 %v378
        %680 = vmatprep.subr.mxu0 %v373
        %681 = vmatpush2.msra.mxu0 %v372
        %682 = vmatprep.mubr.f32.mxu0 %v269
        %683 = vmatmul.mubr.f32.gmra.mxu0 %v268
        %v684 = vpop.f32.mrf.mxu0
        %v685 = vadd.f32 0.0, %v684
        %v686 = vpop.f32.mrf.mxu0
        %v687 = vadd.f32 0.0, %v686
        %688 = vmatprep.mubr.f32.mxu0 %v271
        %689 = vmatmul.mubr.f32.gmra.mxu0 %v270
        %v690 = vpop.f32.mrf.mxu0
        %v691 = vadd.f32 0.0, %v690
        %v692 = vpop.f32.mrf.mxu0
        %v693 = vadd.f32 0.0, %v692
        %694 = vdwg.mxu0
        %v695 = vxor.u32 %v531, 2147483648
        %v696 = vxor.u32 %v533, 2147483648
        %v697 = vxor.u32 %v608, 2147483648
        %v698 = vxor.u32 %v537, 2147483648
        %v699 = vxor.u32 %v539, 2147483648
        %v700 = vxor.u32 %v614, 2147483648
        %v701 = vmul.f32 %v695, 1.442695
        %v702 = vpow.pop %v701
        %v703 = vmul.f32 %v696, 1.442695
        %v704 = vpow.pop %v703
        %v705 = vmul.f32 %v697, 1.442695
        %v706 = vpow.pop %v705
        %v707 = vmul.f32 %v698, 1.442695
        %v708 = vpow.pop %v707
        %v709 = vmul.f32 %v699, 1.442695
        %v710 = vpow.pop %v709
        %v711 = vmul.f32 %v700, 1.442695
        %v712 = vpow.pop %v711
        %v713 = vadd.f32 %v702, 1.0
        %v714 = vadd.f32 %v704, 1.0
        %v715 = vadd.f32 %v706, 1.0
        %v716 = vadd.f32 %v708, 1.0
        %v717 = vadd.f32 %v710, 1.0
        %v718 = vadd.f32 %v712, 1.0
        %v719 = vrcp.pop %v713
        %v720 = vmul.f32 1.0, %v719
        %v721 = vrcp.pop %v714
        %v722 = vmul.f32 1.0, %v721
        %v723 = vrcp.pop %v715
        %v724 = vmul.f32 1.0, %v723
        %v725 = vrcp.pop %v716
        %v726 = vmul.f32 1.0, %v725
        %v727 = vrcp.pop %v717
        %v728 = vmul.f32 1.0, %v727
        %v729 = vrcp.pop %v718
        %v730 = vmul.f32 1.0, %v729
        %v731 = vmul.f32 %v531, %v720
        %v732 = vmul.f32 %v533, %v722
        %v733 = vmul.f32 %v608, %v724
        %v734 = vmul.f32 %v537, %v726
        %v735 = vmul.f32 %v539, %v728
        %v736 = vmul.f32 %v614, %v730
        %v737 = vmul.f32 %v731, %v610
        %v738 = vmul.f32 %v732, %v685
        %v739 = vmul.f32 %v733, %v687
        %v740 = vmul.f32 %v734, %v616
        %v741 = vmul.f32 %v735, %v691
        %v742 = vmul.f32 %v736, %v693
        %v743 = vld [vmem:[#allocation8] sm:$0xff]
        %v744 = vld [vmem:[#allocation8 + $0x8] sm:$0xff]
        %v745 = vld [vmem:[#allocation8 + $0x10] sm:$0xff]
        %v746 = vld [vmem:[#allocation8 + $0x18] sm:$0xff]
        %v747 = vld [vmem:[%s233] sm:$0xff]
        %v748 = vld [vmem:[%s233 + $0x8] sm:$0xff]
        %v749 = vld [vmem:[%s233 + $0x10] sm:$0xff]
        %v750 = vld [vmem:[%s233 + $0x18] sm:$0xff]
        %v751 = vld [vmem:[%s233 + $0x20] sm:$0xff]
        %v752 = vld [vmem:[%s233 + $0x28] sm:$0xff]
        %v753 = vld [vmem:[%s233 + $0x30] sm:$0xff]
        %v754 = vld [vmem:[%s233 + $0x38] sm:$0xff]
        %v755 = vld [vmem:[%s233 + $0x40] sm:$0xff]
        %v756 = vld [vmem:[%s233 + $0x48] sm:$0xff]
        %v757 = vld [vmem:[%s233 + $0x50] sm:$0xff]
        %v758 = vld [vmem:[%s233 + $0x58] sm:$0xff]
        %v759 = vld [vmem:[%s233 + $0x60] sm:$0xff]
        %v760 = vld [vmem:[%s233 + $0x68] sm:$0xff]
        %v761 = vld [vmem:[%s233 + $0x70] sm:$0xff]
        %v762 = vld [vmem:[%s233 + $0x78] sm:$0xff]
        %v763 = vld [vmem:[%s233 + $0x80] sm:$0xff]
        %v764 = vld [vmem:[%s233 + $0x88] sm:$0xff]
        %v765 = vld [vmem:[%s233 + $0x90] sm:$0xff]
        %v766 = vld [vmem:[%s233 + $0x98] sm:$0xff]
        %v767 = vld [vmem:[%s233 + $0xa0] sm:$0xff]
        %v768 = vld [vmem:[%s233 + $0xa8] sm:$0xff]
        %v769 = vld [vmem:[%s233 + $0xb0] sm:$0xff]
        %v770 = vld [vmem:[%s233 + $0xb8] sm:$0xff]
        %v771 = vld [vmem:[%s233 + $0xc0] sm:$0xff]
        %v772 = vld [vmem:[%s233 + $0xc8] sm:$0xff]
        %v773 = vld [vmem:[%s233 + $0xd0] sm:$0xff]
        %v774 = vld [vmem:[%s233 + $0xd8] sm:$0xff]
        %v775 = vld [vmem:[%s233 + $0xe0] sm:$0xff]
        %v776 = vld [vmem:[%s233 + $0xe8] sm:$0xff]
        %v777 = vld [vmem:[%s233 + $0xf0] sm:$0xff]
        %v778 = vld [vmem:[%s233 + $0xf8] sm:$0xff]
        %v779 = vld [vmem:[%s233 + $0x100] sm:$0xff]
        %v780 = vld [vmem:[%s233 + $0x108] sm:$0xff]
        %v781 = vld [vmem:[%s233 + $0x110] sm:$0xff]
        %v782 = vld [vmem:[%s233 + $0x118] sm:$0xff]
        %v783 = vld [vmem:[%s233 + $0x120] sm:$0xff]
        %v784 = vld [vmem:[%s233 + $0x128] sm:$0xff]
        %v785 = vld [vmem:[%s233 + $0x130] sm:$0xff]
        %v786 = vld [vmem:[%s233 + $0x138] sm:$0xff]
        %v787 = vld [vmem:[%s233 + $0x140] sm:$0xff]
        %v788 = vld [vmem:[%s233 + $0x148] sm:$0xff]
        %v789 = vld [vmem:[%s233 + $0x150] sm:$0xff]
        %v790 = vld [vmem:[%s233 + $0x158] sm:$0xff]
        %v791 = vld [vmem:[%s233 + $0x160] sm:$0xff]
        %v792 = vld [vmem:[%s233 + $0x168] sm:$0xff]
        %v793 = vld [vmem:[%s233 + $0x170] sm:$0xff]
        %v794 = vld [vmem:[%s233 + $0x178] sm:$0xff]
        %v795 = vld [vmem:[%s233 + $0x180] sm:$0xff]
        %v796 = vld [vmem:[%s233 + $0x188] sm:$0xff]
        %v797 = vld [vmem:[%s233 + $0x190] sm:$0xff]
        %v798 = vld [vmem:[%s233 + $0x198] sm:$0xff]
        %v799 = vld [vmem:[%s233 + $0x1a0] sm:$0xff]
        %v800 = vld [vmem:[%s233 + $0x1a8] sm:$0xff]
        %v801 = vld [vmem:[%s233 + $0x1b0] sm:$0xff]
        %v802 = vld [vmem:[%s233 + $0x1b8] sm:$0xff]
        %v803 = vld [vmem:[%s233 + $0x1c0] sm:$0xff]
        %v804 = vld [vmem:[%s233 + $0x1c8] sm:$0xff]
        %v805 = vld [vmem:[%s233 + $0x1d0] sm:$0xff]
        %v806 = vld [vmem:[%s233 + $0x1d8] sm:$0xff]
        %v807 = vld [vmem:[%s233 + $0x1e0] sm:$0xff]
        %v808 = vld [vmem:[%s233 + $0x1e8] sm:$0xff]
        %v809 = vld [vmem:[%s233 + $0x1f0] sm:$0xff]
        %v810 = vld [vmem:[%s233 + $0x1f8] sm:$0xff]
        %v811 = vld [vmem:[%s233 + $0x200] sm:$0xff]
        %v812 = vld [vmem:[%s233 + $0x208] sm:$0xff]
        %v813 = vld [vmem:[%s233 + $0x210] sm:$0xff]
        %v814 = vld [vmem:[%s233 + $0x218] sm:$0xff]
        %v815 = vld [vmem:[%s233 + $0x220] sm:$0xff]
        %v816 = vld [vmem:[%s233 + $0x228] sm:$0xff]
        %v817 = vld [vmem:[%s233 + $0x230] sm:$0xff]
        %v818 = vld [vmem:[%s233 + $0x238] sm:$0xff]
        %v819 = vld [vmem:[%s233 + $0x240] sm:$0xff]
        %v820 = vld [vmem:[%s233 + $0x248] sm:$0xff]
        %v821 = vld [vmem:[%s233 + $0x250] sm:$0xff]
        %v822 = vld [vmem:[%s233 + $0x258] sm:$0xff]
        %v823 = vld [vmem:[%s233 + $0x260] sm:$0xff]
        %v824 = vld [vmem:[%s233 + $0x268] sm:$0xff]
        %v825 = vld [vmem:[%s233 + $0x270] sm:$0xff]
        %v826 = vld [vmem:[%s233 + $0x278] sm:$0xff]
        %v827 = vld [vmem:[%s233 + $0x280] sm:$0xff]
        %v828 = vld [vmem:[%s233 + $0x288] sm:$0xff]
        %v829 = vld [vmem:[%s233 + $0x290] sm:$0xff]
        %v830 = vld [vmem:[%s233 + $0x298] sm:$0xff]
        %v831 = vld [vmem:[%s233 + $0x2a0] sm:$0xff]
        %v832 = vld [vmem:[%s233 + $0x2a8] sm:$0xff]
        %v833 = vld [vmem:[%s233 + $0x2b0] sm:$0xff]
        %v834 = vld [vmem:[%s233 + $0x2b8] sm:$0xff]
        %v835 = vld [vmem:[%s233 + $0x2c0] sm:$0xff]
        %v836 = vld [vmem:[%s233 + $0x2c8] sm:$0xff]
        %v837 = vld [vmem:[%s233 + $0x2d0] sm:$0xff]
        %v838 = vld [vmem:[%s233 + $0x2d8] sm:$0xff]
        %v839 = vld [vmem:[%s233 + $0x2e0] sm:$0xff]
        %v840 = vld [vmem:[%s233 + $0x2e8] sm:$0xff]
        %v841 = vld [vmem:[%s233 + $0x2f0] sm:$0xff]
        %v842 = vld [vmem:[%s233 + $0x2f8] sm:$0xff]
        %843 = vmatprep.subr.mxu0 %v778
        %844 = vmatpush1.msra.mxu0 %v777
        %845 = vmatprep.subr.mxu0 %v776
        %846 = vmatpush1.msra.mxu0 %v775
        %847 = vmatprep.subr.mxu0 %v774
        %848 = vmatpush1.msra.mxu0 %v773
        %849 = vmatprep.subr.mxu0 %v772
        %850 = vmatpush1.msra.mxu0 %v771
        %851 = vmatprep.subr.mxu0 %v770
        %852 = vmatpush1.msra.mxu0 %v769
        %853 = vmatprep.subr.mxu0 %v768
        %854 = vmatpush1.msra.mxu0 %v767
        %855 = vmatprep.subr.mxu0 %v766
        %856 = vmatpush1.msra.mxu0 %v765
        %857 = vmatprep.subr.mxu0 %v764
        %858 = vmatpush1.msra.mxu0 %v763
        %859 = vmatprep.subr.mxu0 %v762
        %860 = vmatpush1.msra.mxu0 %v761
        %861 = vmatprep.subr.mxu0 %v760
        %862 = vmatpush1.msra.mxu0 %v759
        %863 = vmatprep.subr.mxu0 %v758
        %864 = vmatpush1.msra.mxu0 %v757
        %865 = vmatprep.subr.mxu0 %v756
        %866 = vmatpush1.msra.mxu0 %v755
        %867 = vmatprep.subr.mxu0 %v754
        %868 = vmatpush1.msra.mxu0 %v753
        %869 = vmatprep.subr.mxu0 %v752
        %870 = vmatpush1.msra.mxu0 %v751
        %871 = vmatprep.subr.mxu0 %v750
        %872 = vmatpush1.msra.mxu0 %v749
        %873 = vmatprep.subr.mxu0 %v748
        %874 = vmatpush1.msra.mxu0 %v747
        %875 = vmatprep.subr.mxu0 %v810
        %876 = vmatpush2.msra.mxu0 %v809
        %877 = vmatprep.subr.mxu0 %v808
        %878 = vmatpush2.msra.mxu0 %v807
        %879 = vmatprep.subr.mxu0 %v806
        %880 = vmatpush2.msra.mxu0 %v805
        %881 = vmatprep.subr.mxu0 %v804
        %882 = vmatpush2.msra.mxu0 %v803
        %883 = vmatprep.subr.mxu0 %v802
        %884 = vmatpush2.msra.mxu0 %v801
        %885 = vmatprep.subr.mxu0 %v800
        %886 = vmatpush2.msra.mxu0 %v799
        %887 = vmatprep.subr.mxu0 %v798
        %888 = vmatpush2.msra.mxu0 %v797
        %889 = vmatprep.subr.mxu0 %v796
        %890 = vmatpush2.msra.mxu0 %v795
        %891 = vmatprep.subr.mxu0 %v794
        %892 = vmatpush2.msra.mxu0 %v793
        %893 = vmatprep.subr.mxu0 %v792
        %894 = vmatpush2.msra.mxu0 %v791
        %895 = vmatprep.subr.mxu0 %v790
        %896 = vmatpush2.msra.mxu0 %v789
        %897 = vmatprep.subr.mxu0 %v788
        %898 = vmatpush2.msra.mxu0 %v787
        %899 = vmatprep.subr.mxu0 %v786
        %900 = vmatpush2.msra.mxu0 %v785
        %901 = vmatprep.subr.mxu0 %v784
        %902 = vmatpush2.msra.mxu0 %v783
        %903 = vmatprep.subr.mxu0 %v782
        %904 = vmatpush2.msra.mxu0 %v781
        %905 = vmatprep.subr.mxu0 %v780
        %906 = vmatpush2.msra.mxu0 %v779
        %907 = vmatprep.mubr.f32.mxu0 %v738
        %908 = vmatmul.mubr.f32.gmra.mxu0 %v737
        %v909 = vpop.f32.mrf.mxu0
        %v910 = vadd.f32 0.0, %v909
        %v911 = vpop.f32.mrf.mxu0
        %v912 = vadd.f32 0.0, %v911
        %913 = vmatprep.mubr.f32.mxu0 %v741
        %914 = vmatmul.mubr.f32.gmra.mxu0 %v740
        %v915 = vpop.f32.mrf.mxu0
        %v916 = vadd.f32 0.0, %v915
        %v917 = vpop.f32.mrf.mxu0
        %v918 = vadd.f32 0.0, %v917
        %919 = vdwg.mxu0
        %920 = vmatprep.subr.mxu0 %v842
        %921 = vmatpush1.msra.mxu0 %v841
        %922 = vmatprep.subr.mxu0 %v840
        %923 = vmatpush1.msra.mxu0 %v839
        %924 = vmatprep.subr.mxu0 %v838
        %925 = vmatpush1.msra.mxu0 %v837
        %926 = vmatprep.subr.mxu0 %v836
        %927 = vmatpush1.msra.mxu0 %v835
        %928 = vmatprep.subr.mxu0 %v834
        %929 = vmatpush1.msra.mxu0 %v833
        %930 = vmatprep.subr.mxu0 %v832
        %931 = vmatpush1.msra.mxu0 %v831
        %932 = vmatprep.subr.mxu0 %v830
        %933 = vmatpush1.msra.mxu0 %v829
        %934 = vmatprep.subr.mxu0 %v828
        %935 = vmatpush1.msra.mxu0 %v827
        %936 = vmatprep.subr.mxu0 %v826
        %937 = vmatpush1.msra.mxu0 %v825
        %938 = vmatprep.subr.mxu0 %v824
        %939 = vmatpush1.msra.mxu0 %v823
        %940 = vmatprep.subr.mxu0 %v822
        %941 = vmatpush1.msra.mxu0 %v821
        %942 = vmatprep.subr.mxu0 %v820
        %943 = vmatpush1.msra.mxu0 %v819
        %944 = vmatprep.subr.mxu0 %v818
        %945 = vmatpush1.msra.mxu0 %v817
        %946 = vmatprep.subr.mxu0 %v816
        %947 = vmatpush1.msra.mxu0 %v815
        %948 = vmatprep.subr.mxu0 %v814
        %949 = vmatpush1.msra.mxu0 %v813
        %950 = vmatprep.subr.mxu0 %v812
        %951 = vmatpush1.msra.mxu0 %v811
        %952 = vmatprep.subr.mxu0 0.0
        %953 = vmatpush2.msra.mxu0 0.0
        %954 = vmatprep.subr.mxu0 0.0
        %955 = vmatpush2.msra.mxu0 0.0
        %956 = vmatprep.subr.mxu0 0.0
        %957 = vmatpush2.msra.mxu0 0.0
        %958 = vmatprep.subr.mxu0 0.0
        %959 = vmatpush2.msra.mxu0 0.0
        %960 = vmatprep.subr.mxu0 0.0
        %961 = vmatpush2.msra.mxu0 0.0
        %962 = vmatprep.subr.mxu0 0.0
        %963 = vmatpush2.msra.mxu0 0.0
        %964 = vmatprep.subr.mxu0 0.0
        %965 = vmatpush2.msra.mxu0 0.0
        %966 = vmatprep.subr.mxu0 0.0
        %967 = vmatpush2.msra.mxu0 0.0
        %968 = vmatprep.subr.mxu0 0.0
        %969 = vmatpush2.msra.mxu0 0.0
        %970 = vmatprep.subr.mxu0 0.0
        %971 = vmatpush2.msra.mxu0 0.0
        %972 = vmatprep.subr.mxu0 0.0
        %973 = vmatpush2.msra.mxu0 0.0
        %974 = vmatprep.subr.mxu0 0.0
        %975 = vmatpush2.msra.mxu0 0.0
        %976 = vmatprep.subr.mxu0 0.0
        %977 = vmatpush2.msra.mxu0 0.0
        %978 = vmatprep.subr.mxu0 0.0
        %979 = vmatpush2.msra.mxu0 0.0
        %980 = vmatprep.subr.mxu0 0.0
        %981 = vmatpush2.msra.mxu0 0.0
        %982 = vmatprep.subr.mxu0 0.0
        %983 = vmatpush2.msra.mxu0 0.0
        %984 = vmatprep.mubr.f32.mxu0 0.0
        %985 = vmatmul.mubr.f32.gmra.mxu0 %v739
        %v986 = vpop.f32.mrf.mxu0
        %v987 = vadd.f32 %v910, %v986
        %v988 = vpop.f32.mrf.mxu0
        %v989 = vadd.f32 %v912, %v988
        %990 = vmatprep.mubr.f32.mxu0 0.0
        %991 = vmatmul.mubr.f32.gmra.mxu0 %v742
        %v992 = vpop.f32.mrf.mxu0
        %v993 = vadd.f32 %v916, %v992
        %v994 = vpop.f32.mrf.mxu0
        %v995 = vadd.f32 %v918, %v994
        %996 = vdwg.mxu0
        %v997 = vadd.f32 %v743, %v987
        %v998 = vadd.f32 %v744, %v989
        %v999 = vadd.f32 %v745, %v993
        %v1000 = vadd.f32 %v746, %v995
        %1001 = vst [vmem:[#allocation8] sm:$0xff] %v997
        %1002 = vst [vmem:[#allocation8 + $0x8] sm:$0xff] %v998
        %1003 = vst [vmem:[#allocation8 + $0x10] sm:$0xff] %v999
        %1004 = vst [vmem:[#allocation8 + $0x18] sm:$0xff] %v1000
        // Predicated region
        $region49: #{tpu_custom_call.1} parent=31 // pred_check
          %p1005 = pneg %p127
        $region50: #{tpu_custom_call.1} parent=31 // pred_check_branch
          %1007 = sbr.rel (%p1005) target = $region52
        $region51: #{tpu_custom_call.1} parent=31 // pred_region
          %s1008 = smul.u32 2, %s23
          %s1010 = ssub.s32 512, 512
          %1011 = vsyncadd [#allocation4], %s1010
          %s1012 = smul.addr %s1008, 2
          %s1013 = smul.addr %s1012, 128
          %s1014 = scalar_lea.hbm %s3, %s1013
          %s1015 = sshll.u32 [#allocation8], 4
          %s1016 = int_to_ptr.vmem [resolvable:$true] %s1015
          %1021 = dma.vmem_to_hbm [thread:$0]  %s1016, 512, %s1014, [#allocation4], 256, 256, 16
        $region52: #{tpu_custom_call.1} parent=31 // pred_fallthru
          _
        // Predicated region
        $region53: #{tpu_custom_call.1} parent=31 // pred_check
          %p1022 = pneg %p127
        $region54: #{tpu_custom_call.1} parent=31 // pred_check_branch
          %1024 = sbr.rel (%p1022) target = $region56
        $region55: #{tpu_custom_call.1} parent=31 // pred_region
          %1025 = dma.done [#allocation4], 512
        $region56: #{tpu_custom_call.1} parent=31 // pred_fallthru
          _
      $region32: #{tpu_custom_call.1} parent=5 // pred_fallthru
        _
      %p1026 = scmp.le.s32.totalorder 2, %s14
      // Predicated region
      $region57: #{tpu_custom_call.1} parent=5 // pred_check
        %p1027 = pneg %p1026
      $region58: #{tpu_custom_call.1} parent=5 // pred_check_branch
        %1029 = sbr.rel (%p1027) target = $region60
      $region59: #{tpu_custom_call.1} parent=5 // pred_region
        %s1030 = ssub.s32 %s14, 2
      $region60: #{tpu_custom_call.1} parent=5 // pred_fallthru
        _
    $region6: #{tpu_custom_call.1} parent=1 // loop_footer
      %s18 = sadd.s32 1, %s14
    $region7: #{tpu_custom_call.1} parent=1 // loop_footer_branch
      %13 = sbr.rel target = $region3
    $region8: #{tpu_custom_call.1} parent=1 // loop_exit
      _
    %1031 = vsyncpa [#allocation3], 1
    %s1032 = scalar_lea.sflag [#allocation3], 1
    %1033 = vsyncpa %s1032, 1
    %1034 = vsyncpa [#allocation6], 1
    %s1035 = scalar_lea.sflag [#allocation6], 1
    %1036 = vsyncpa %s1035, 1
    %1037 = vsyncpa [#allocation4], 1
    %s1038 = scalar_lea.sflag [#allocation4], 1
    %1039 = vsyncpa %s1038, 1

</llo_original>
